<compile_context>
chip_gen: v5e
topology: v5e:2x2
jax: 0.10.0
libtpu: 0.0.40
codegen_flags: <defaults>
</compile_context>

<pallas_src>
import functools
import math

import jax
import jax.numpy as jnp
from jax.experimental import pallas as pl
from jax.experimental.pallas import tpu as pltpu


# ---------------------------------------------------------------------------
# Kernels
# ---------------------------------------------------------------------------
def _uq_affine_kernel(x_ref, scale_ref, inv_scale_ref, beta_ref, o_ref, *,
                      qmin, qmax, compute_dtype):
    """Learned path: quantize->dequantize one (tm, lane) row tile."""
    x = x_ref[...].astype(compute_dtype)                  # (tm, lane) streamed
    s = scale_ref[0:1, :].astype(compute_dtype)           # resident (8,lane), row 0
    inv_s = inv_scale_ref[0:1, :].astype(compute_dtype)
    b = beta_ref[0:1, :].astype(compute_dtype)
    code = jnp.clip((x - b) * inv_s, float(qmin), float(qmax))
    o_ref[...] = (jnp.round(code) * s + b).astype(o_ref.dtype)


def _uq_plain_kernel(x_ref, o_ref, *, qmin, qmax, compute_dtype):
    """Non-learned path: scale/beta folded into static constants."""
    x = x_ref[...].astype(compute_dtype)
    code = jnp.clip(x * float(qmax), float(qmin), float(qmax))
    o_ref[...] = (jnp.round(code) * (1.0 / float(qmax))).astype(o_ref.dtype)


# ---------------------------------------------------------------------------
# Wrapper helpers
# ---------------------------------------------------------------------------
def _cdiv(a, b):
    return -(-a // b)


def _round_up(a, b):
    return _cdiv(a, b) * b


def _fold_factors(c):
    """Lane-dense folding: view (N, C) as (N/reps, lane) with lane % 128 == 0."""
    if c % 128 == 0:
        return 1, c
    reps = 128 // math.gcd(c, 128)
    return reps, c * reps


def _prep_param_rows(scale, beta, reps, lane):
    """Pre-broadcast per-channel params to (8, lane) resident tiles (one-time)."""
    scale_f = scale.astype(jnp.float32)
    beta_f = beta.astype(jnp.float32)
    inv_scale_f = 1.0 / scale_f          # exact reciprocal, C values only
    s_row = jnp.tile(jnp.tile(scale_f, reps)[None, :], (8, 1))
    is_row = jnp.tile(jnp.tile(inv_scale_f, reps)[None, :], (8, 1))
    b_row = jnp.tile(jnp.tile(beta_f, reps)[None, :], (8, 1))
    return s_row, is_row, b_row


def _choose_tm(m, row_bytes, target_bytes):
    """Row tile: ~target_bytes/buffer, multiple of 32, >=2 grid steps when possible."""
    tm = max(32, (target_bytes // max(row_bytes, 1)) // 32 * 32)
    tm = min(tm, _round_up(m, 32))
    # v7x has 2 TensorCores; make sure the ("parallel",) row axis gives at
    # least 2 grid steps for medium inputs so both cores stream HBM.
    if m >= 64 and _cdiv(m, tm) < 2:
        tm = max(32, _round_up(_cdiv(m, 2), 32))
    return tm


def _vmem_limit_bytes(tm, lane, x_itemsize, learned):
    blk = tm * lane
    io = 2 * blk * x_itemsize * 2          # double-buffered x tile + out tile
    scratch = 2 * blk * 4                  # headroom for in-kernel f32 temps
    params = (3 * 2 * 8 * lane * 4) if learned else 0
    est = io + scratch + params + (2 << 20)
    # Floor at 16 MiB (harmless everywhere), cap well under v7x's 64 MiB.
    return int(min(max(est, 16 << 20), 48 << 20))


def _folded_call(x2, param_rows, *, qmin, qmax, target_block_bytes,
                 compute_dtype):
    """Run the kernel on an already lane-dense (m, lane) array."""
    m, lane = x2.shape
    dt = x2.dtype
    row_bytes = lane * jnp.dtype(dt).itemsize
    tm = _choose_tm(m, row_bytes, target_block_bytes)
    grid = (pl.cdiv(m, tm),)               # last block may overhang; no padding
    learned = param_rows is not None

    x_spec = pl.BlockSpec((tm, lane), lambda i: (i, 0))
    out_spec = pl.BlockSpec((tm, lane), lambda i: (i, 0))
    if learned:
        p_spec = pl.BlockSpec((8, lane), lambda i: (0, 0))    # resident params
        kernel = functools.partial(_uq_affine_kernel, qmin=qmin, qmax=qmax,
                                   compute_dtype=compute_dtype)
        in_specs = [x_spec, p_spec, p_spec, p_spec]
        args = (x2,) + tuple(param_rows)
    else:
        kernel = functools.partial(_uq_plain_kernel, qmin=qmin, qmax=qmax,
                                   compute_dtype=compute_dtype)
        in_specs = [x_spec]
        args = (x2,)

    return pl.pallas_call(
        kernel,
        out_shape=jax.ShapeDtypeStruct((m, lane), dt),
        grid_spec=pltpu.PrefetchScalarGridSpec(
            num_scalar_prefetch=0,
            grid=grid,
            in_specs=in_specs,
            out_specs=out_spec,
        ),
        compiler_params=pltpu.CompilerParams(
            dimension_semantics=("parallel",),
            vmem_limit_bytes=_vmem_limit_bytes(
                tm, lane, jnp.dtype(dt).itemsize, learned),
        ),
    )(*args)


def uniform_quantize(x, scale=None, beta=None, *, qmin, qmax,
                     param_rows=None, target_block_bytes=2 << 20,
                     compute_dtype=jnp.float32):
    """Pallas wrapper. x: (N, C); scale/beta: (C,) or None (non-learned).

    `param_rows` may be passed to reuse pre-broadcast (8, lane) parameter rows
    (see _prep_param_rows), avoiding per-call prep.
    """
    n, c = x.shape
    reps, lane = _fold_factors(c)
    learned = (scale is not None) or (param_rows is not None)
    if learned and param_rows is None:
        param_rows = _prep_param_rows(scale, beta, reps, lane)

    # Lane-dense folding: single pad (only if needed) + free contiguous reshape.
    if reps == 1:
        x2, m, padded = x, n, False
    else:
        pad_rows = (-n) % reps
        if pad_rows:
            x = jnp.pad(x, ((0, pad_rows), (0, 0)))
        m = (n + pad_rows) // reps
        x2 = x.reshape(m, lane)
        padded = pad_rows > 0

    out2 = _folded_call(x2, param_rows if learned else None,
                        qmin=qmin, qmax=qmax,
                        target_block_bytes=target_block_bytes,
                        compute_dtype=compute_dtype)

    if reps == 1:
        return out2
    out = out2.reshape(m * reps, c)
    return out[:n] if padded else out


# ---------------------------------------------------------------------------
# Module port
# ---------------------------------------------------------------------------
class UniformQuantizerPallas:
    """JAX/Pallas port of UniformQuantizer (forward pass)."""

    def __init__(self, signed=False, bits=8, learned=False, num_channels=1,
                 entropy_type="none", weight=0.001,
                 compute_dtype=jnp.float32):
        if signed:
            self.qmin = -(2 ** (bits - 1))
            self.qmax = 2 ** (bits - 1) - 1
        else:
            self.qmin = 0
            self.qmax = 2 ** bits - 1
        self.learned = learned
        self.entropy_type = entropy_type
        self.weight = weight
        self.num_channels = num_channels
        self.compute_dtype = compute_dtype
        self._reps, self._lane = _fold_factors(num_channels)
        if self.learned:
            # Mirrors the PyTorch init: BOTH scale and beta are ones/qmax.
            scale = jnp.ones((num_channels,), jnp.float32) / self.qmax
            beta = jnp.ones((num_channels,), jnp.float32) / self.qmax
            self.set_params(scale, beta)
        else:
            self.scale = None
            self.beta = None
            self._param_rows = None

    def set_params(self, scale, beta):
        """Update scale/beta and refresh the cached (8, lane) resident rows."""
        self.scale = scale
        self.beta = beta
        self._param_rows = _prep_param_rows(scale, beta, self._reps, self._lane)

    def __call__(self, x):
        assert x.ndim == 2 and x.shape[1] == self.num_channels
        if self.learned:
            dequant = uniform_quantize(x, qmin=self.qmin, qmax=self.qmax,
                                       param_rows=self._param_rows,
                                       compute_dtype=self.compute_dtype)
        else:
            dequant = uniform_quantize(x, qmin=self.qmin, qmax=self.qmax,
                                       compute_dtype=self.compute_dtype)
        entropy_loss = 0.0
        bits = 0  # TODO(synk): eval-mode ANS bitstream size (constriction) not implementable in Pallas.
        return dequant, entropy_loss * self.weight, bits


# ---------------------------------------------------------------------------
# References & self-test
# ---------------------------------------------------------------------------
def _reference_learned(x, scale, beta, qmin, qmax):
    # Same fp ordering as the kernel (multiply by precomputed reciprocal);
    # true division could differ by one level only exactly at .5 boundaries.
    inv_s = 1.0 / scale
    code = jnp.clip((x - beta[None, :]) * inv_s[None, :], qmin, qmax)
    return jnp.round(code) * scale[None, :] + beta[None, :]


def _reference_plain(x, qmin, qmax):
    code = jnp.clip(x * qmax, qmin, qmax)
    return jnp.round(code) * (1.0 / qmax)


if __name__ == "__main__":
    key = jax.random.PRNGKey(0)
    k1, k2 = jax.random.split(key)

    # learned quantizer, small (N, C) consistent with the forward pass
    num_points, num_channels = 64, 32
    x = jax.random.uniform(k1, (num_points, num_channels), jnp.float32)
    q_learned = UniformQuantizerPallas(signed=False, bits=8, learned=True,
                                       num_channels=num_channels)
    dq, eloss, bits = q_learned(x)
    dq = jax.block_until_ready(dq)
    ref = _reference_learned(x, q_learned.scale, q_learned.beta,
                             q_learned.qmin, q_learned.qmax)
    assert dq.shape == x.shape and dq.dtype == x.dtype
    assert jnp.allclose(dq, ref, atol=1e-5), "learned path mismatch"

    # non-learned quantizer; row count exercises the lane-folding pad + slice
    x2 = jax.random.uniform(k2, (50, num_channels), jnp.float32)
    q_plain = UniformQuantizerPallas(signed=False, bits=8, learned=False,
                                     num_channels=num_channels)
    dq2, _, _ = q_plain(x2)
    dq2 = jax.block_until_ready(dq2)
    ref2 = _reference_plain(x2, q_plain.qmin, q_plain.qmax)
    assert dq2.shape == x2.shape
    assert jnp.allclose(dq2, ref2, atol=1e-5), "non-learned path mismatch"

    print("KERNEL_OK")
</pallas_src>

<mosaic_0001>
module attributes {stable_mosaic.version = 11 : i64} {
  func.func @_uq_affine_kernel(%arg0: i32, %arg1: memref<32x128xf32, #tpu.memory_space<vmem>>, %arg2: memref<8x128xf32, #tpu.memory_space<vmem>>, %arg3: memref<8x128xf32, #tpu.memory_space<vmem>>, %arg4: memref<8x128xf32, #tpu.memory_space<vmem>>, %arg5: memref<32x128xf32, #tpu.memory_space<vmem>>) attributes {dimension_semantics = [#tpu.dimension_semantics<parallel>], iteration_bounds = array<i64: 1>, scalar_prefetch = 0 : i64, scratch_operands = 0 : i64, tpu.core_type = #tpu.core_type<tc>, window_params = [{transform_indices = @transform_0, window_bounds = array<i64: 32, 128>}, {pipeline_mode = #tpu.pipeline_mode<synchronous>, transform_indices = @transform_1, window_bounds = array<i64: 8, 128>}, {pipeline_mode = #tpu.pipeline_mode<synchronous>, transform_indices = @transform_2, window_bounds = array<i64: 8, 128>}, {pipeline_mode = #tpu.pipeline_mode<synchronous>, transform_indices = @transform_3, window_bounds = array<i64: 8, 128>}, {transform_indices = @transform_4, window_bounds = array<i64: 32, 128>}]} {
    %c0 = arith.constant 0 : index
    %c0_0 = arith.constant 0 : index
    %0 = vector.load %arg1[%c0, %c0_0] : memref<32x128xf32, #tpu.memory_space<vmem>>, vector<32x128xf32>
    %c0_1 = arith.constant 0 : index
    %c0_2 = arith.constant 0 : index
    %1 = vector.load %arg2[%c0_1, %c0_2] : memref<8x128xf32, #tpu.memory_space<vmem>>, vector<1x128xf32>
    %c0_3 = arith.constant 0 : index
    %c0_4 = arith.constant 0 : index
    %2 = vector.load %arg3[%c0_3, %c0_4] : memref<8x128xf32, #tpu.memory_space<vmem>>, vector<1x128xf32>
    %c0_5 = arith.constant 0 : index
    %c0_6 = arith.constant 0 : index
    %3 = vector.load %arg4[%c0_5, %c0_6] : memref<8x128xf32, #tpu.memory_space<vmem>>, vector<1x128xf32>
    %4 = vector.broadcast %3 : vector<1x128xf32> to vector<32x128xf32>
    %5 = arith.subf %0, %4 : vector<32x128xf32>
    %6 = vector.broadcast %2 : vector<1x128xf32> to vector<32x128xf32>
    %7 = arith.mulf %5, %6 : vector<32x128xf32>
    %cst = arith.constant 0.000000e+00 : f32
    %cst_7 = arith.constant 2.550000e+02 : f32
    %8 = vector.broadcast %cst : f32 to vector<32x128xf32>
    %9 = arith.maximumf %8, %7 : vector<32x128xf32>
    %10 = vector.broadcast %cst_7 : f32 to vector<32x128xf32>
    %11 = arith.minimumf %10, %9 : vector<32x128xf32>
    %12 = math.roundeven %11 : vector<32x128xf32>
    %13 = vector.broadcast %1 : vector<1x128xf32> to vector<32x128xf32>
    %14 = arith.mulf %12, %13 : vector<32x128xf32>
    %15 = vector.broadcast %3 : vector<1x128xf32> to vector<32x128xf32>
    %16 = arith.addf %14, %15 : vector<32x128xf32>
    %c0_8 = arith.constant 0 : index
    %c0_9 = arith.constant 0 : index
    %17 = vector.load %arg5[%c0_8, %c0_9] : memref<32x128xf32, #tpu.memory_space<vmem>>, vector<32x128xf32>
    tpu.vector_store %arg5[%c0_8, %c0_9], %16 {strides = array<i32>} : memref<32x128xf32, #tpu.memory_space<vmem>>, vector<32x128xf32>,
    return
  }
  func.func @transform_0(%arg0: i32) -> (i32, i32) {
    %c0_i32 = arith.constant 0 : i32
    %c0_i32_0 = arith.constant 0 : i32
    return %arg0, %c0_i32 : i32, i32
  }
  func.func @transform_1(%arg0: i32) -> (i32, i32) {
    %c0_i32 = arith.constant 0 : i32
    %c0_i32_0 = arith.constant 0 : i32
    %c0_i32_1 = arith.constant 0 : i32
    return %c0_i32, %c0_i32_0 : i32, i32
  }
  func.func @transform_2(%arg0: i32) -> (i32, i32) {
    %c0_i32 = arith.constant 0 : i32
    %c0_i32_0 = arith.constant 0 : i32
    %c0_i32_1 = arith.constant 0 : i32
    return %c0_i32, %c0_i32_0 : i32, i32
  }
  func.func @transform_3(%arg0: i32) -> (i32, i32) {
    %c0_i32 = arith.constant 0 : i32
    %c0_i32_0 = arith.constant 0 : i32
    %c0_i32_1 = arith.constant 0 : i32
    return %c0_i32, %c0_i32_0 : i32, i32
  }
  func.func @transform_4(%arg0: i32) -> (i32, i32) {
    %c0_i32 = arith.constant 0 : i32
    %c0_i32_0 = arith.constant 0 : i32
    return %arg0, %c0_i32 : i32, i32
  }
}

</mosaic_0001>

<llo_original>
// kernel: tpu_custom_call.1
$region0: #{tpu_custom_call.1}
  #allocation0 [shape = 'u32[]', space=smem, size = 0x4, offset = 0x4, fixed_abs, tag = 'smem constant byte address 0x4 - core index']
  #allocation1 [shape = 'u32[72,128]{1,0:T(1,128)}', space=vmem, size = 0x9000, scoped, tag = 'internal scratch']
  %s0 = inlined_call_operand.hbm [shape: f32[16,128], index: 0, kind: input, shape index: {}]
  %s1 = inlined_call_operand.hbm [shape: f32[8,128], index: 1, kind: input, shape index: {}]
  %s2 = inlined_call_operand.hbm [shape: f32[8,128], index: 2, kind: input, shape index: {}]
  %s3 = inlined_call_operand.hbm [shape: f32[8,128], index: 3, kind: input, shape index: {}]
  %s4 = inlined_call_operand.hbm [shape: f32[16,128], index: 4, kind: output, shape index: {}]
  %s5 = sld [smem:[#allocation0]]
  $region42: #{tpu_custom_call.1} parent=0
    _
  %s7 = ssub.s32 1, %s5
  %s8 = scalar_select 0, %s7, %s5
  $region1: #{tpu_custom_call.1} parent=0
    #allocation2 [shape = 'u8[16384]{0}', space=vmem, size = 0x4000, scoped, tag = 'input window, operand 0, single buffered']
    #allocation3 [shape = 's32[1]{0}', space=sflag, size = 0x4, scoped, tag = 'scoped memory for tpu_custom_call.1']
    #allocation4 [shape = 's32[1]{0}', space=sflag, size = 0x4, scoped, tag = 'scoped memory for tpu_custom_call.1']
    #allocation5 [shape = 'u8[4096]{0}', space=vmem, size = 0x1000, scoped, tag = 'input window, operand 1, single buffered']
    #allocation6 [shape = 's32[1]{0}', space=sflag, size = 0x4, scoped, tag = 'scoped memory for tpu_custom_call.1']
    #allocation7 [shape = 'u8[4096]{0}', space=vmem, size = 0x1000, scoped, tag = 'input window, operand 2, single buffered']
    #allocation8 [shape = 'u8[4096]{0}', space=vmem, size = 0x1000, scoped, tag = 'input window, operand 3, single buffered']
    #allocation9 [shape = 's32[1]{0}', space=sflag, size = 0x4, scoped, tag = 'scoped memory for tpu_custom_call.1']
    #allocation10 [shape = 'u8[16384]{0}', space=vmem, size = 0x4000, scoped, tag = 'output window, operand 0, single buffered']
    %9 = vsyncpa [#allocation3], 0
    %10 = vsyncpa [#allocation6], 0
    %11 = vsyncpa [#allocation9], 0
    %12 = vsyncpa [#allocation4], 0
    // Predicated region
    $region2: #{tpu_custom_call.1} parent=1 // pred_check
      _
    $region3: #{tpu_custom_call.1} parent=1 // pred_check_branch
      %14 = sbr.rel (0) target = $region5
    $region4: #{tpu_custom_call.1} parent=1 // pred_region
      %16 = vsyncadd [#allocation3], 256
      %s17 = sshll.u32 %s0, 4
      %s18 = int_to_ptr.hbm [resolvable:$true] %s17
      %s19 = sshll.u32 [#allocation2], 4
      %s20 = int_to_ptr.vmem [resolvable:$true] %s19
      %25 = dma.hbm_to_vmem [thread:$0]  %s18, 256, %s20, [#allocation3], 128, 128, 8
    $region5: #{tpu_custom_call.1} parent=1 // pred_fallthru
      _
    // Predicated region
    $region6: #{tpu_custom_call.1} parent=1 // pred_check
      _
    $region7: #{tpu_custom_call.1} parent=1 // pred_check_branch
      %27 = sbr.rel (0) target = $region9
    $region8: #{tpu_custom_call.1} parent=1 // pred_region
      %29 = vsyncadd [#allocation6], 0
      %s31 = sshll.u32 %s1, 4
      %s32 = int_to_ptr.hbm [resolvable:$true] %s31
      %s33 = sshll.u32 [#allocation5], 4
      %s34 = int_to_ptr.vmem [resolvable:$true] %s33
      %36 = dma.hbm_to_vmem [thread:$0]  %s32, 128, %s34, [#allocation6]
    $region9: #{tpu_custom_call.1} parent=1 // pred_fallthru
      _
    // Predicated region
    $region10: #{tpu_custom_call.1} parent=1 // pred_check
      _
    $region11: #{tpu_custom_call.1} parent=1 // pred_check_branch
      %38 = sbr.rel (0) target = $region13
    $region12: #{tpu_custom_call.1} parent=1 // pred_region
      %40 = vsyncadd [#allocation6], 0
      %s42 = sshll.u32 %s2, 4
      %s43 = int_to_ptr.hbm [resolvable:$true] %s42
      %s44 = sshll.u32 [#allocation7], 4
      %s45 = int_to_ptr.vmem [resolvable:$true] %s44
      %47 = dma.hbm_to_vmem [thread:$0]  %s43, 128, %s45, [#allocation6]
    $region13: #{tpu_custom_call.1} parent=1 // pred_fallthru
      _
    // Predicated region
    $region14: #{tpu_custom_call.1} parent=1 // pred_check
      _
    $region15: #{tpu_custom_call.1} parent=1 // pred_check_branch
      %49 = sbr.rel (0) target = $region17
    $region16: #{tpu_custom_call.1} parent=1 // pred_region
      %51 = vsyncadd [#allocation9], 0
      %s53 = sshll.u32 %s3, 4
      %s54 = int_to_ptr.hbm [resolvable:$true] %s53
      %s55 = sshll.u32 [#allocation8], 4
      %s56 = int_to_ptr.vmem [resolvable:$true] %s55
      %58 = dma.hbm_to_vmem [thread:$0]  %s54, 128, %s56, [#allocation9]
    $region17: #{tpu_custom_call.1} parent=1 // pred_fallthru
      _
    // Predicated region
    $region18: #{tpu_custom_call.1} parent=1 // pred_check
      _
    $region19: #{tpu_custom_call.1} parent=1 // pred_check_branch
      %60 = sbr.rel (0) target = $region21
    $region20: #{tpu_custom_call.1} parent=1 // pred_region
      %62 = dma.done [#allocation3], 512
    $region21: #{tpu_custom_call.1} parent=1 // pred_fallthru
      _
    // Predicated region
    $region22: #{tpu_custom_call.1} parent=1 // pred_check
      _
    $region23: #{tpu_custom_call.1} parent=1 // pred_check_branch
      %64 = sbr.rel (0) target = $region25
    $region24: #{tpu_custom_call.1} parent=1 // pred_region
      %66 = dma.done [#allocation6], 128
    $region25: #{tpu_custom_call.1} parent=1 // pred_fallthru
      _
    // Predicated region
    $region26: #{tpu_custom_call.1} parent=1 // pred_check
      _
    $region27: #{tpu_custom_call.1} parent=1 // pred_check_branch
      %68 = sbr.rel (0) target = $region29
    $region28: #{tpu_custom_call.1} parent=1 // pred_region
      %70 = dma.done [#allocation6], 128
    $region29: #{tpu_custom_call.1} parent=1 // pred_fallthru
      _
    // Predicated region
    $region30: #{tpu_custom_call.1} parent=1 // pred_check
      _
    $region31: #{tpu_custom_call.1} parent=1 // pred_check_branch
      %72 = sbr.rel (0) target = $region33
    $region32: #{tpu_custom_call.1} parent=1 // pred_region
      %74 = dma.done [#allocation9], 128
    $region33: #{tpu_custom_call.1} parent=1 // pred_fallthru
      _
    %v75 = vld [vmem:[#allocation2] sm:$0xff]
    %v76 = vld [vmem:[#allocation2 + $0x8] sm:$0xff]
    %v77 = vld [vmem:[#allocation2 + $0x10] sm:$0xff]
    %v78 = vld [vmem:[#allocation2 + $0x18] sm:$0xff]
    %v79 = vld [vmem:[#allocation5] sm:$0x1]
    %v80 = vld [vmem:[#allocation7] sm:$0x1]
    %v81 = vld [vmem:[#allocation8] sm:$0x1]
    %v82 = vperm.slane %v81, 0
    %v83 = vsub.f32 %v75, %v82
    %v84 = vsub.f32 %v76, %v82
    %v85 = vsub.f32 %v77, %v82
    %v86 = vsub.f32 %v78, %v82
    %v87 = vperm.slane %v80, 0
    %v88 = vmul.f32 %v83, %v87
    %v89 = vmul.f32 %v84, %v87
    %v90 = vmul.f32 %v85, %v87
    %v91 = vmul.f32 %v86, %v87
    %v92 = vmax.f32 %v88, 0.0
    %v93 = vmax.f32 %v89, 0.0
    %v94 = vmax.f32 %v90, 0.0
    %v95 = vmax.f32 %v91, 0.0
    %v96 = vmin.f32 %v92, 255.0
    %v97 = vmin.f32 %v93, 255.0
    %v98 = vmin.f32 %v94, 255.0
    %v99 = vmin.f32 %v95, 255.0
    %v100 = vround.ne.pseudo %v96
    %v101 = vround.ne.pseudo %v97
    %v102 = vround.ne.pseudo %v98
    %v103 = vround.ne.pseudo %v99
    %v104 = vperm.slane %v79, 0
    %v105 = vmul.f32 %v100, %v104
    %v106 = vmul.f32 %v101, %v104
    %v107 = vmul.f32 %v102, %v104
    %v108 = vmul.f32 %v103, %v104
    %v109 = vadd.f32 %v105, %v82
    %v110 = vadd.f32 %v106, %v82
    %v111 = vadd.f32 %v107, %v82
    %v112 = vadd.f32 %v108, %v82
    %113 = vst [vmem:[#allocation10] sm:$0xff] %v109
    %114 = vst [vmem:[#allocation10 + $0x8] sm:$0xff] %v110
    %115 = vst [vmem:[#allocation10 + $0x10] sm:$0xff] %v111
    %116 = vst [vmem:[#allocation10 + $0x18] sm:$0xff] %v112
    // Predicated region
    $region34: #{tpu_custom_call.1} parent=1 // pred_check
      _
    $region35: #{tpu_custom_call.1} parent=1 // pred_check_branch
      %118 = sbr.rel (0) target = $region37
    $region36: #{tpu_custom_call.1} parent=1 // pred_region
      %120 = vsyncadd [#allocation4], 256
      %s121 = sshll.u32 [#allocation10], 4
      %s122 = int_to_ptr.vmem [resolvable:$true] %s121
      %s123 = sshll.u32 %s4, 4
      %s124 = int_to_ptr.hbm [resolvable:$true] %s123
      %129 = dma.vmem_to_hbm [thread:$0]  %s122, 256, %s124, [#allocation4], 128, 128, 8
    $region37: #{tpu_custom_call.1} parent=1 // pred_fallthru
      _
    // Predicated region
    $region38: #{tpu_custom_call.1} parent=1 // pred_check
      _
    $region39: #{tpu_custom_call.1} parent=1 // pred_check_branch
      %131 = sbr.rel (0) target = $region41
    $region40: #{tpu_custom_call.1} parent=1 // pred_region
      %133 = dma.done [#allocation4], 512
    $region41: #{tpu_custom_call.1} parent=1 // pred_fallthru
      _
    %134 = vsyncpa [#allocation3], 1
    %135 = vsyncpa [#allocation6], 1
    %136 = vsyncpa [#allocation9], 1
    %137 = vsyncpa [#allocation4], 1

</llo_original>
